<compile_context>
chip_gen: v7x
topology: tpu7x:2x2x1
jax: 0.10.0
libtpu: 0.0.40
codegen_flags: <defaults>
</compile_context>

<pallas_src>
import functools
import math

import jax
import jax.numpy as jnp
from jax.experimental import pallas as pl
from jax.experimental.pallas import tpu as pltpu


def shift_scale_points(pred_xyz, src_range, dst_range=None):
    """pred_xyz: B x N x 3; src/dst_range: [(B,3) min, (B,3) max]. Plain-JAX glue."""
    if dst_range is None:
        dst_range = [
            jnp.zeros((src_range[0].shape[0], 3), dtype=pred_xyz.dtype),
            jnp.ones((src_range[0].shape[0], 3), dtype=pred_xyz.dtype),
        ]
    src_diff = src_range[1][:, None, :] - src_range[0][:, None, :]
    dst_diff = dst_range[1][:, None, :] - dst_range[0][:, None, :]
    return (pred_xyz - src_range[0][:, None, :]) * dst_diff / src_diff + dst_range[0][:, None, :]


def _fourier_kernel(x_ref, b_ref, o_ref, *, d_out):
    # x_ref: (1, Nt, 3)   b_ref: (d_out, 3) [2*pi pre-folded]   o_ref: (1, 2*d_out, Nt)
    x = x_ref[0]                                                   # (Nt, 3)
    # Contract the size-3 coordinate axis: (d_out, 3) x (Nt, 3)^T -> (d_out, Nt).
    proj = jax.lax.dot_general(
        b_ref[...], x,
        dimension_numbers=(((1,), (1,)), ((), ())),
        preferred_element_type=jnp.float32)
    # NOTE: jnp.sin/jnp.cos expand to VALU range-reduction + polynomial; if
    # profiling shows VALU saturation, a single shared range reduction feeding
    # both polynomials would further cut the hot-path VALU ops.
    o_ref[0, :d_out, :] = jnp.sin(proj).astype(o_ref.dtype)
    o_ref[0, d_out:, :] = jnp.cos(proj).astype(o_ref.dtype)


def _pick_n_tile(n_points, d_out, target=2048, vmem_budget_bytes=24 << 20):
    """Lane tile over N: multiple of 128, sized so double-buffered input +
    output tiles fit comfortably under the default scoped VMEM on all parts."""
    # Input tile lane-pads its size-3 minor dim to 128 lanes in VMEM.
    bytes_per_point = 2 * (128 * 4) + 2 * (2 * d_out * 4)
    cap = max(128, (vmem_budget_bytes // bytes_per_point) // 128 * 128)
    n_ceil = -(-n_points // 128) * 128
    return max(128, min(target, cap, n_ceil))


def fourier_pos_embed_pallas(xyz, gauss_B_T, *, n_tile=None, out_dtype=jnp.float32):
    """xyz: (B, N, 3) f32;  gauss_B_T: (d_out, 3) f32 (2*pi pre-folded)
    -> (B, 2*d_out, N), matching torch.cat([sin, cos], dim=2).permute(0, 2, 1)."""
    B, N, d_in = xyz.shape
    d_out = gauss_B_T.shape[0]
    nt = n_tile if n_tile is not None else _pick_n_tile(N, d_out)
    grid = (pl.cdiv(N, nt), B)
    kernel = functools.partial(_fourier_kernel, d_out=d_out)
    return pl.pallas_call(
        kernel,
        out_shape=jax.ShapeDtypeStruct((B, 2 * d_out, N), out_dtype),
        grid=grid,
        in_specs=[
            pl.BlockSpec((1, nt, d_in), lambda n, b: (b, n, 0)),
            # Constant index_map: the tiny weight tile stays VMEM-resident
            # across all grid steps (no per-step re-DMA).
            pl.BlockSpec((d_out, d_in), lambda n, b: (0, 0)),
        ],
        out_specs=pl.BlockSpec((1, 2 * d_out, nt), lambda n, b: (b, 0, n)),
        compiler_params=pltpu.CompilerParams(
            dimension_semantics=("parallel", "parallel")),
        # Tiles are budgeted to fit the default 32 MiB scoped VMEM; raise
        # vmem_limit_bytes here if larger Nt is wanted on 128 MiB parts.
    )(xyz, gauss_B_T)


class PositionEmbeddingCoordsSinePallas:
    """Fourier positional embedding matching the PyTorch module's forward()."""

    def __init__(self, temperature=10000, normalize=False, scale=None,
                 pos_type="fourier", d_pos=None, d_in=3, gauss_scale=1.0,
                 key=None, n_tile=None, out_dtype=jnp.float32):
        if scale is not None and normalize is False:
            raise ValueError("normalize should be True if scale is passed")
        if scale is None:
            scale = 2 * math.pi
        assert pos_type in ["sine", "fourier"]
        self.pos_type = pos_type
        self.normalize = normalize
        self.scale = scale          # NOTE: unused in the fourier branch (same as PyTorch).
        self.temperature = temperature
        self.d_pos = d_pos
        self.n_tile = n_tile
        self.out_dtype = out_dtype  # set to jnp.bfloat16 if the consumer tolerates it
        if pos_type == "fourier":
            assert d_pos is not None and d_pos % 2 == 0
            if key is None:
                key = jax.random.PRNGKey(0)
            # Deterministic stand-in for PyTorch's empty().normal_() * gauss_scale.
            self.gauss_B = (jax.random.normal(key, (d_in, d_pos // 2), dtype=jnp.float32)
                            * jnp.float32(gauss_scale))
            # Fold 2*pi into the (tiny) weight once; store transposed for the kernel.
            self._gauss_B_T_2pi = (self.gauss_B * jnp.float32(2.0 * math.pi)).T  # (d_pos//2, 3)

    def __call__(self, xyz, num_channels=None, input_range=None):
        assert xyz.ndim == 3
        if self.pos_type != "fourier":
            raise NotImplementedError("only pos_type='fourier' implemented as a Pallas kernel")
        if num_channels is None:
            num_channels = self.gauss_B.shape[1] * 2
        assert num_channels > 0 and num_channels % 2 == 0
        d_in, max_d_out = self.gauss_B.shape
        d_out = num_channels // 2
        assert d_out <= max_d_out
        assert d_in == xyz.shape[-1]

        x = xyz.astype(jnp.float32)
        if self.normalize:
            x = shift_scale_points(x, src_range=input_range)

        # Keep the sublane dim of each output half 8-aligned (unmasked stores).
        d_out_pad = -(-d_out // 8) * 8
        w = self._gauss_B_T_2pi[:d_out]                              # (d_out, 3)
        if d_out_pad != d_out:
            w = jnp.pad(w, ((0, d_out_pad - d_out), (0, 0)))

        y = fourier_pos_embed_pallas(x, w, n_tile=self.n_tile,
                                     out_dtype=self.out_dtype)       # (B, 2*d_out_pad, N)
        if d_out_pad != d_out:
            y = jnp.concatenate([y[:, :d_out, :],
                                 y[:, d_out_pad:d_out_pad + d_out, :]], axis=1)
        return y


def _reference_fourier(xyz, gauss_B, d_out):
    x = xyz.astype(jnp.float32) * (2.0 * jnp.pi)
    proj = jnp.einsum("bnd,de->bne", x, gauss_B[:, :d_out])
    out = jnp.concatenate([jnp.sin(proj), jnp.cos(proj)], axis=2)
    return jnp.transpose(out, (0, 2, 1))


if __name__ == "__main__":
    key = jax.random.PRNGKey(0)
    k_xyz, k_B, k_xyz2 = jax.random.split(key, 3)

    # --- Test 1: basic fourier path (single tile along N). ---
    B, N, d_in, d_pos = 2, 128, 3, 64
    xyz = jax.random.uniform(k_xyz, (B, N, d_in), dtype=jnp.float32)
    mod = PositionEmbeddingCoordsSinePallas(pos_type="fourier", d_pos=d_pos,
                                            d_in=d_in, gauss_scale=1.0, key=k_B)
    out = jax.block_until_ready(mod(xyz))
    ref = _reference_fourier(xyz, mod.gauss_B, d_pos // 2)
    assert out.shape == (B, d_pos, N), out.shape
    assert jnp.allclose(out, ref, atol=1e-4, rtol=1e-4), float(jnp.max(jnp.abs(out - ref)))

    # --- Test 2: multi-tile grid along N (exercises the (N/Nt, B) pipeline). ---
    B2, N2, d_pos2 = 2, 384, 32
    xyz2 = jax.random.uniform(k_xyz2, (B2, N2, d_in), dtype=jnp.float32) * 2.0 - 1.0
    mod2 = PositionEmbeddingCoordsSinePallas(pos_type="fourier", d_pos=d_pos2,
                                             d_in=d_in, gauss_scale=1.0, key=k_B,
                                             n_tile=128)
    out2 = jax.block_until_ready(mod2(xyz2))
    ref2 = _reference_fourier(xyz2, mod2.gauss_B, d_pos2 // 2)
    assert out2.shape == (B2, d_pos2, N2), out2.shape
    assert jnp.allclose(out2, ref2, atol=1e-4, rtol=1e-4), float(jnp.max(jnp.abs(out2 - ref2)))

    # --- Test 3: normalize=True path (shift_scale_points glue + kernel). ---
    rng_min = xyz2.min(axis=1)   # (B, 3)
    rng_max = xyz2.max(axis=1)   # (B, 3)
    mod3 = PositionEmbeddingCoordsSinePallas(pos_type="fourier", normalize=True,
                                             d_pos=d_pos2, d_in=d_in, key=k_B,
                                             n_tile=128)
    out3 = jax.block_until_ready(mod3(xyz2, input_range=[rng_min, rng_max]))
    xyz2_n = shift_scale_points(xyz2.astype(jnp.float32), src_range=[rng_min, rng_max])
    ref3 = _reference_fourier(xyz2_n, mod3.gauss_B, d_pos2 // 2)
    assert out3.shape == (B2, d_pos2, N2), out3.shape
    assert jnp.allclose(out3, ref3, atol=1e-4, rtol=1e-4), float(jnp.max(jnp.abs(out3 - ref3)))

    print("KERNEL_OK")
</pallas_src>

<mosaic_0001>
module attributes {stable_mosaic.version = 11 : i64} {
  func.func @_fourier_kernel(%arg0: i32, %arg1: i32, %arg2: memref<1x128x3xf32, #tpu.memory_space<vmem>>, %arg3: memref<32x3xf32, #tpu.memory_space<vmem>>, %arg4: memref<1x64x128xf32, #tpu.memory_space<vmem>>) attributes {dimension_semantics = [#tpu.dimension_semantics<parallel>, #tpu.dimension_semantics<parallel>], iteration_bounds = array<i64: 1, 2>, scalar_prefetch = 0 : i64, scratch_operands = 0 : i64, tpu.core_type = #tpu.core_type<tc>, window_params = [{transform_indices = @transform_0, window_bounds = array<i64: 1, 128, 3>}, {pipeline_mode = #tpu.pipeline_mode<synchronous>, transform_indices = @transform_1, window_bounds = array<i64: 32, 3>}, {transform_indices = @transform_2, window_bounds = array<i64: 1, 64, 128>}]} {
    %c0 = arith.constant 0 : index
    %c0_0 = arith.constant 0 : index
    %c0_1 = arith.constant 0 : index
    %0 = vector.load %arg2[%c0, %c0_0, %c0_1] : memref<1x128x3xf32, #tpu.memory_space<vmem>>, vector<1x128x3xf32>
    %1 = vector.shape_cast %0 : vector<1x128x3xf32> to vector<128x3xf32>
    %c0_2 = arith.constant 0 : index
    %c0_3 = arith.constant 0 : index
    %2 = vector.load %arg3[%c0_2, %c0_3] : memref<32x3xf32, #tpu.memory_space<vmem>>, vector<32x3xf32>
    %cst = arith.constant dense<0.000000e+00> : vector<32x128xf32>
    %3 = tpu.matmul %2, %1, %cst {dimension_numbers = #tpu.dot_dimension_numbers<[1], [1], [0], [0], [0, 0, 1, 0], [], []>} : vector<32x3xf32>, vector<128x3xf32>, vector<32x128xf32> -> vector<32x128xf32>
    %4 = math.sin %3 : vector<32x128xf32>
    %c0_4 = arith.constant 0 : index
    %c0_5 = arith.constant 0 : index
    %c0_6 = arith.constant 0 : index
    %5 = vector.load %arg4[%c0_4, %c0_5, %c0_6] : memref<1x64x128xf32, #tpu.memory_space<vmem>>, vector<1x32x128xf32>
    %6 = vector.shape_cast %5 : vector<1x32x128xf32> to vector<32x128xf32>
    %7 = vector.shape_cast %4 : vector<32x128xf32> to vector<1x32x128xf32>
    tpu.vector_store %arg4[%c0_4, %c0_5, %c0_6], %7 {strides = array<i32>} : memref<1x64x128xf32, #tpu.memory_space<vmem>>, vector<1x32x128xf32>,
    %8 = math.cos %3 : vector<32x128xf32>
    %c0_7 = arith.constant 0 : index
    %c32 = arith.constant 32 : index
    %c0_8 = arith.constant 0 : index
    %9 = vector.load %arg4[%c0_7, %c32, %c0_8] : memref<1x64x128xf32, #tpu.memory_space<vmem>>, vector<1x32x128xf32>
    %10 = vector.shape_cast %9 : vector<1x32x128xf32> to vector<32x128xf32>
    %11 = vector.shape_cast %8 : vector<32x128xf32> to vector<1x32x128xf32>
    tpu.vector_store %arg4[%c0_7, %c32, %c0_8], %11 {strides = array<i32>} : memref<1x64x128xf32, #tpu.memory_space<vmem>>, vector<1x32x128xf32>,
    return
  }
  func.func @transform_0(%arg0: i32, %arg1: i32) -> (i32, i32, i32) {
    %c0_i32 = arith.constant 0 : i32
    %c0_i32_0 = arith.constant 0 : i32
    return %arg1, %arg0, %c0_i32 : i32, i32, i32
  }
  func.func @transform_1(%arg0: i32, %arg1: i32) -> (i32, i32) {
    %c0_i32 = arith.constant 0 : i32
    %c0_i32_0 = arith.constant 0 : i32
    %c0_i32_1 = arith.constant 0 : i32
    return %c0_i32, %c0_i32_0 : i32, i32
  }
  func.func @transform_2(%arg0: i32, %arg1: i32) -> (i32, i32, i32) {
    %c0_i32 = arith.constant 0 : i32
    %c0_i32_0 = arith.constant 0 : i32
    return %arg1, %c0_i32, %arg0 : i32, i32, i32
  }
}

</mosaic_0001>

<llo_original>
// kernel: tpu_custom_call.1
$region0: #{tpu_custom_call.1}
  #allocation0 [shape = 'u32[]', space=smem, size = 0x4, offset = 0x4, fixed_abs, tag = 'smem constant byte address 0x4 - core index']
  #allocation1 [shape = 'u32[144,128]{1,0:T(1,128)}', space=vmem, size = 0x12000, scoped, tag = 'internal scratch']
  %s0 = inlined_call_operand.vmem [shape: f32[2,128,3], index: 0, kind: input, shape index: {}]
  %s1 = inlined_call_operand.vmem [shape: f32[32,3], index: 1, kind: input, shape index: {}]
  %s2 = inlined_call_operand.hbm [shape: f32[2,64,128], index: 2, kind: output, shape index: {}]
  %s3 = sld [smem:[#allocation0]]
  $region41: #{tpu_custom_call.1} parent=0
    _
  %s5 = ssub.s32 1, %s3
  %s6 = scalar_select 0, %s5, %s3
  $region1: #{tpu_custom_call.1} parent=0
    #allocation2 [shape = 'u8[65536]{0}', space=vmem, size = 0x10000, scoped, tag = 'output window, operand 0']
    #allocation3 [shape = 's32[2]{0}', space=sflag, size = 0x8, scoped, tag = 'scoped memory for tpu_custom_call.1']
    %7 = vsyncpa [#allocation3], 0
    %s8 = scalar_lea.sflag [#allocation3], 1
    %9 = vsyncpa %s8, 0
    loop: start=0, step=1, limit=4
    $region2: #{tpu_custom_call.1} parent=1 // loop_pre_header
      _
    $region3: #{tpu_custom_call.1} parent=1 // loop_header
      %s11 = sphi 0, %s15
      %p12 = scmp.ge.s32.totalorder %s11, 4
      %s18 = sphi 0, %s30
      %s19 = sphi 0, %s26
      %s20 = sphi 0, %s18
      %s21 = sphi 0, %s19
      %s22 = sphi 0, %s20
      %s23 = sphi 0, %s21
      %s35 = sphi 0, %s37
      %s38 = sphi 0, %s35
      %s39 = sphi 0, %s38
      %s55 = sphi 0, %s39
      %s59 = sphi 0, %s59
      %s61 = sphi 0, %s59
      %s62 = sphi 0, %s61
      %s76 = sphi 0, %s62
      %s84 = sphi 0, %s86
      %s87 = sphi 0, %s84
      %s88 = sphi 0, %s87
      %s104 = sphi 0, %s88
    $region4: #{tpu_custom_call.1} parent=1 // loop_header_branch
      %14 = sbr.rel (%p12) target = $region8
    $region5: #{tpu_custom_call.1} parent=1 // loop_body
      %s16 = ssub.s32 %s11, 1
      %s17 = ssub.s32 %s11, 2
      %s24 = sadd.s32 1, %s19
      %p25 = scmp.ge.s32.totalorder %s24, 2
      %s26 = scalar_select %p25, 0, %s24
      %s27 = sadd.s32 1, %s18
      %s28 = scalar_select %p25, %s27, %s18
      %p29 = scmp.ge.s32.totalorder %s28, 1
      %s30 = scalar_select %p29, 0, %s28
      %s31 = ssub.s32 %s19, %s26
      %s32 = ssub.s32 %s18, %s30
      %s33 = sor.u32 %s31, %s32
      %p34 = scmp.eq.s32.totalorder %s33, 0
      %s36 = sadd.s32 %s35, 1
      %s37 = scalar_select %p34, %s35, %s36
      %p40 = pneg %p34
      %p41 = scmp.eq.s32.totalorder %s11, 1
      %p42 = por %p40, %p41
      %p43 = scmp.ne.s32.totalorder %s35, %s38
      %p44 = scmp.eq.s32.totalorder %s11, 0
      %p45 = por %p43, %p44
      %p46 = scmp.ne.s32.totalorder %s35, %s38
      %p47 = scmp.eq.s32.totalorder %s16, 1
      %p48 = por %p46, %p47
      %p49 = scmp.ne.s32.totalorder %s38, %s39
      %p50 = scmp.eq.s32.totalorder %s16, 0
      %p51 = por %p49, %p50
      %p52 = scmp.ne.s32.totalorder %s38, %s39
      %p53 = scmp.eq.s32.totalorder %s17, 1
      %p54 = por %p52, %p53
      %p56 = scmp.ne.s32.totalorder %s39, %s55
      %p57 = scmp.eq.s32.totalorder %s17, 0
      %p58 = por %p56, %p57
      %s60 = sadd.s32 %s59, 1
      %p63 = scmp.eq.s32.totalorder %s11, 1
      %p64 = scmp.ne.s32.totalorder %s59, %s61
      %p65 = scmp.eq.s32.totalorder %s11, 0
      %p66 = por %p64, %p65
      %p67 = scmp.ne.s32.totalorder %s59, %s61
      %p68 = scmp.eq.s32.totalorder %s16, 1
      %p69 = por %p67, %p68
      %p70 = scmp.ne.s32.totalorder %s61, %s62
      %p71 = scmp.eq.s32.totalorder %s16, 0
      %p72 = por %p70, %p71
      %p73 = scmp.ne.s32.totalorder %s61, %s62
      %p74 = scmp.eq.s32.totalorder %s17, 1
      %p75 = por %p73, %p74
      %p77 = scmp.ne.s32.totalorder %s62, %s76
      %p78 = scmp.eq.s32.totalorder %s17, 0
      %p79 = por %p77, %p78
      %s80 = ssub.s32 %s19, %s26
      %s81 = ssub.s32 %s18, %s30
      %s82 = sor.u32 %s80, %s81
      %p83 = scmp.eq.s32.totalorder %s82, 0
      %s85 = sadd.s32 %s84, 1
      %s86 = scalar_select %p83, %s84, %s85
      %p89 = pneg %p83
      %p90 = scmp.eq.s32.totalorder %s11, 1
      %p91 = por %p89, %p90
      %p92 = scmp.ne.s32.totalorder %s84, %s87
      %p93 = scmp.eq.s32.totalorder %s11, 0
      %p94 = por %p92, %p93
      %p95 = scmp.ne.s32.totalorder %s84, %s87
      %p96 = scmp.eq.s32.totalorder %s16, 1
      %p97 = por %p95, %p96
      %p98 = scmp.ne.s32.totalorder %s87, %s88
      %p99 = scmp.eq.s32.totalorder %s16, 0
      %p100 = por %p98, %p99
      %p101 = scmp.ne.s32.totalorder %s87, %s88
      %p102 = scmp.eq.s32.totalorder %s17, 1
      %p103 = por %p101, %p102
      %p105 = scmp.ne.s32.totalorder %s88, %s104
      %p106 = scmp.eq.s32.totalorder %s17, 0
      %p107 = por %p105, %p106
      %p108 = scmp.le.s32.totalorder 1, %s11
      %p109 = scmp.lt.s32.totalorder %s11, 3
      %p110 = pnand %p108, %p109
      %p111 = pneg %p110
      // Predicated region
      $region9: #{tpu_custom_call.1} parent=5 // pred_check
        _
      $region10: #{tpu_custom_call.1} parent=5 // pred_check_branch
        %113 = sbr.rel (%p110) target = $region12
      $region11: #{tpu_custom_call.1} parent=5 // pred_region
        %s114 = ssub.s32 %s11, 1
        // Predicated region
        $region13: #{tpu_custom_call.1} parent=11 // pred_check
          %p115 = pneg %p72
        $region14: #{tpu_custom_call.1} parent=11 // pred_check_branch
          %117 = sbr.rel (%p115) target = $region16
        $region15: #{tpu_custom_call.1} parent=11 // pred_region
          _
        $region16: #{tpu_custom_call.1} parent=11 // pred_fallthru
          _
      $region12: #{tpu_custom_call.1} parent=5 // pred_fallthru
        _
      %p118 = scmp.lt.s32.totalorder %s11, 2
      // Predicated region
      $region17: #{tpu_custom_call.1} parent=5 // pred_check
        %p119 = pneg %p118
      $region18: #{tpu_custom_call.1} parent=5 // pred_check_branch
        %121 = sbr.rel (%p119) target = $region20
      $region19: #{tpu_custom_call.1} parent=5 // pred_region
        // Predicated region
        $region21: #{tpu_custom_call.1} parent=19 // pred_check
          %p122 = pneg %p45
        $region22: #{tpu_custom_call.1} parent=19 // pred_check_branch
          %124 = sbr.rel (%p122) target = $region24
        $region23: #{tpu_custom_call.1} parent=19 // pred_region
          %s125 = smul.u32 16, %s18
          %p126 = scmp.lt.s32.totalorder %s19, 1
          %s127 = scalar_select %p126, %s19, 1
          %p128 = scmp.lt.s32.totalorder %s125, 15
          %s129 = scalar_select %p128, %s125, 15
          %s130 = smul.addr %s127, 16
          %s131 = sadd.s32 %s129, %s130
          %s132 = smul.addr %s131, 8
          %s133 = scalar_lea.vmem %s0, %s132
          %s134 = smul.u32 16, %s18
        $region24: #{tpu_custom_call.1} parent=19 // pred_fallthru
          _
      $region20: #{tpu_custom_call.1} parent=5 // pred_fallthru
        _
      %p135 = scmp.le.s32.totalorder 1, %s11
      %p136 = scmp.lt.s32.totalorder %s11, 3
      %p137 = pnand %p135, %p136
      %p138 = pneg %p137
      // Predicated region
      $region25: #{tpu_custom_call.1} parent=5 // pred_check
        _
      $region26: #{tpu_custom_call.1} parent=5 // pred_check_branch
        %140 = sbr.rel (%p137) target = $region28
      $region27: #{tpu_custom_call.1} parent=5 // pred_region
        %s141 = ssub.s32 %s11, 1
        %s142 = smul.u32 16, %s20
        %p143 = scmp.lt.s32.totalorder %s21, 1
        %s144 = scalar_select %p143, %s21, 1
        %p145 = scmp.lt.s32.totalorder %s142, 15
        %s146 = scalar_select %p145, %s142, 15
        %s147 = smul.addr %s144, 16
        %s148 = sadd.s32 %s146, %s147
        %s149 = smul.addr %s148, 8
        %s150 = scalar_lea.vmem %s0, %s149
        %p151 = pneg %p51
        %p152 = pneg %p48
        %p153 = pneg %p72
        %p154 = pneg %p69
        %p155 = pneg %p100
        %p156 = pneg %p97
        %s157 = sand.u32 %s87, 1
        %s158 = scalar_lea.sflag [#allocation3], %s157
        %s159 = sand.u32 %s87, 1
        %s160 = smul.addr %s159, 64
        %s161 = scalar_lea.vmem [#allocation2], %s160
        %s162 = smul.u32 16, %s20
        %p163 = scmp.lt.s32.totalorder %s21, 1
        %s164 = scalar_select %p163, %s21, 1
        %p165 = scmp.lt.s32.totalorder %s162, 15
        %s166 = scalar_select %p165, %s162, 15
        %s167 = smul.addr %s164, 16
        %s168 = sadd.s32 %s166, %s167
        %s169 = smul.addr %s168, 8
        %s170 = scalar_lea.vmem %s0, %s169
        %s171 = smul.u32 16, %s20
        %v172 = vld [vmem:[%s170] sm:$0xff]
        %v173 = vld [vmem:[%s170 + $0x8] sm:$0xff]
        %v174 = vld [vmem:[%s170 + $0x10] sm:$0xff]
        %v175 = vld [vmem:[%s170 + $0x18] sm:$0xff]
        %v176 = vld [vmem:[%s170 + $0x20] sm:$0xff]
        %v177 = vld [vmem:[%s170 + $0x28] sm:$0xff]
        %v178 = vld [vmem:[%s170 + $0x30] sm:$0xff]
        %v179 = vld [vmem:[%s170 + $0x38] sm:$0xff]
        %v180 = vld [vmem:[%s170 + $0x40] sm:$0xff]
        %v181 = vld [vmem:[%s170 + $0x48] sm:$0xff]
        %v182 = vld [vmem:[%s170 + $0x50] sm:$0xff]
        %v183 = vld [vmem:[%s170 + $0x58] sm:$0xff]
        %v184 = vld [vmem:[%s170 + $0x60] sm:$0xff]
        %v185 = vld [vmem:[%s170 + $0x68] sm:$0xff]
        %v186 = vld [vmem:[%s170 + $0x70] sm:$0xff]
        %v187 = vld [vmem:[%s170 + $0x78] sm:$0xff]
        %v188 = vld [vmem:[%s1] sm:$0xff]
        %v189 = vld [vmem:[%s1 + $0x8] sm:$0xff]
        %v190 = vld [vmem:[%s1 + $0x10] sm:$0xff]
        %v191 = vld [vmem:[%s1 + $0x18] sm:$0xff]
        %vm192 = vcmask 23552
        %v194 = vsel %vm192, %v188, 0
        %v197 = vsel %vm192, %v189, 0
        %v200 = vsel %vm192, %v190, 0
        %v203 = vsel %vm192, %v191, 0
        %v206 = vsel %vm192, %v172, 0
        %v209 = vsel %vm192, %v173, 0
        %v212 = vsel %vm192, %v174, 0
        %v215 = vsel %vm192, %v175, 0
        %v218 = vsel %vm192, %v176, 0
        %v221 = vsel %vm192, %v177, 0
        %v224 = vsel %vm192, %v178, 0
        %v227 = vsel %vm192, %v179, 0
        %v230 = vsel %vm192, %v180, 0
        %v233 = vsel %vm192, %v181, 0
        %v236 = vsel %vm192, %v182, 0
        %v239 = vsel %vm192, %v183, 0
        %v242 = vsel %vm192, %v184, 0
        %v245 = vsel %vm192, %v185, 0
        %v248 = vsel %vm192, %v186, 0
        %v251 = vsel %vm192, %v187, 0
        %253 = vmatprep.subr.mxu0 0.0
        %254 = vmatpush1.xpose.msra.mxu0 %v206
        %255 = vmatprep.subr.mxu0 0.0
        %256 = vmatpush1.xpose.msra.mxu0 %v209
        %257 = vmatprep.subr.mxu0 0.0
        %258 = vmatpush1.xpose.msra.mxu0 %v212
        %259 = vmatprep.subr.mxu0 0.0
        %260 = vmatpush1.xpose.msra.mxu0 %v215
        %261 = vmatprep.subr.mxu0 0.0
        %262 = vmatpush1.xpose.msra.mxu0 %v218
        %263 = vmatprep.subr.mxu0 0.0
        %264 = vmatpush1.xpose.msra.mxu0 %v221
        %265 = vmatprep.subr.mxu0 0.0
        %266 = vmatpush1.xpose.msra.mxu0 %v224
        %267 = vmatprep.subr.mxu0 0.0
        %268 = vmatpush1.xpose.msra.mxu0 %v227
        %269 = vmatprep.subr.mxu0 0.0
        %270 = vmatpush1.xpose.msra.mxu0 %v230
        %271 = vmatprep.subr.mxu0 0.0
        %272 = vmatpush1.xpose.msra.mxu0 %v233
        %273 = vmatprep.subr.mxu0 0.0
        %274 = vmatpush1.xpose.msra.mxu0 %v236
        %275 = vmatprep.subr.mxu0 0.0
        %276 = vmatpush1.xpose.msra.mxu0 %v239
        %277 = vmatprep.subr.mxu0 0.0
        %278 = vmatpush1.xpose.msra.mxu0 %v242
        %279 = vmatprep.subr.mxu0 0.0
        %280 = vmatpush1.xpose.msra.mxu0 %v245
        %281 = vmatprep.subr.mxu0 0.0
        %282 = vmatpush1.xpose.msra.mxu0 %v248
        %283 = vmatprep.subr.mxu0 0.0
        %284 = vmatpush1.xpose.msra.mxu0 %v251
        %285 = vmatprep.subr.mxu0 0.0
        %286 = vmatpush1.xpose.msra.mxu0 0.0
        %287 = vmatprep.subr.mxu0 0.0
        %288 = vmatpush1.xpose.msra.mxu0 0.0
        %289 = vmatprep.subr.mxu0 0.0
        %290 = vmatpush1.xpose.msra.mxu0 0.0
        %291 = vmatprep.subr.mxu0 0.0
        %292 = vmatpush1.xpose.msra.mxu0 0.0
        %293 = vmatprep.subr.mxu0 0.0
        %294 = vmatpush1.xpose.msra.mxu0 0.0
        %295 = vmatprep.subr.mxu0 0.0
        %296 = vmatpush1.xpose.msra.mxu0 0.0
        %297 = vmatprep.subr.mxu0 0.0
        %298 = vmatpush1.xpose.msra.mxu0 0.0
        %299 = vmatprep.subr.mxu0 0.0
        %300 = vmatpush1.xpose.msra.mxu0 0.0
        %301 = vmatprep.subr.mxu0 0.0
        %302 = vmatpush1.xpose.msra.mxu0 0.0
        %303 = vmatprep.subr.mxu0 0.0
        %304 = vmatpush1.xpose.msra.mxu0 0.0
        %305 = vmatprep.subr.mxu0 0.0
        %306 = vmatpush1.xpose.msra.mxu0 0.0
        %307 = vmatprep.subr.mxu0 0.0
        %308 = vmatpush1.xpose.msra.mxu0 0.0
        %309 = vmatprep.subr.mxu0 0.0
        %310 = vmatpush1.xpose.msra.mxu0 0.0
        %311 = vmatprep.subr.mxu0 0.0
        %312 = vmatpush1.xpose.msra.mxu0 0.0
        %313 = vmatprep.subr.mxu0 0.0
        %314 = vmatpush1.xpose.msra.mxu0 0.0
        %315 = vmatprep.subr.mxu0 0.0
        %316 = vmatpush1.xpose.msra.mxu0 0.0
        %317 = vmatprep.mubr.f32.mxu0 0.0
        %318 = vmatmul.mubr.f32.gmra.mrb[0].mxu0 %v194
        %v319 = vpop.f32.mrb[0].mxu0
        %v320 = vadd.f32 0.0, %v319
        %v321 = vpop.f32.mrb[0].mxu0
        %322 = vmatprep.mubr.f32.mxu0 0.0
        %323 = vmatmul.mubr.f32.gmra.mrb[0].mxu0 %v197
        %v324 = vpop.f32.mrb[0].mxu0
        %v325 = vadd.f32 0.0, %v324
        %v326 = vpop.f32.mrb[0].mxu0
        %327 = vmatprep.mubr.f32.mxu0 0.0
        %328 = vmatmul.mubr.f32.gmra.mrb[0].mxu0 %v200
        %v329 = vpop.f32.mrb[0].mxu0
        %v330 = vadd.f32 0.0, %v329
        %v331 = vpop.f32.mrb[0].mxu0
        %332 = vmatprep.mubr.f32.mxu0 0.0
        %333 = vmatmul.mubr.f32.gmra.mrb[0].mxu0 %v203
        %v334 = vpop.f32.mrb[0].mxu0
        %v335 = vadd.f32 0.0, %v334
        %v336 = vpop.f32.mrb[0].mxu0
        %337 = vdwg.mxu0
        %v338 = vand.u32 2147483647, %v320
        %vm339 = vcmp.le.f32.partialorder %v338, 0.7853982
        %vm340 = vcmp.lt.s32.totalorder %v320, 0
        %v341 = vand.u32 %v320, 2139095040
        %v342 = vshrl.u32 %v341, 23
        %v343 = vsub.s32 %v342, 127
        %v344 = vand.u32 2147483647, %v320
        %v345 = vand.u32 %v344, 8388607
        %v346 = vor.u32 %v345, 8388608
        %v347 = vsub.s32 0, %v346
        %v348 = vadd.s32 %v343, 1
        %vm349 = vcmp.gt.s32.totalorder %v348, 0
        %v350 = vsel %vm349, %v348, 0
        %v351 = vshrl.u32 %v350, 5
        %v352 = vand.u32 %v350, 31
        %v353 = vsub.s32 32, %v352
        %v354 = vshrl.u32 683565275, %v353
        %v355 = vshll.u32 683565275, %v352
        %v356 = vshrl.u32 2475754826, %v353
        %v357 = vor.u32 %v355, %v356
        %v358 = vshll.u32 2475754826, %v352
        %v359 = vshrl.u32 2131351028, %v353
        %v360 = vor.u32 %v358, %v359
        %v361 = vshll.u32 2131351028, %v352
        %v362 = vshrl.u32 2102212464, %v353
        %v363 = vor.u32 %v361, %v362
        %v364 = vshll.u32 2102212464, %v352
        %v365 = vshrl.u32 920167782, %v353
        %v366 = vor.u32 %v364, %v365
        %v367 = vshll.u32 920167782, %v352
        %v368 = vshrl.u32 1326507024, %v353
        %v369 = vor.u32 %v367, %v368
        %vm370 = vcmp.lt.s32.totalorder %v351, 1
        %vm371 = vcmp.lt.s32.totalorder %v351, 2
        %vm372 = vcmp.lt.s32.totalorder %v351, 3
        %vm373 = vcmp.lt.s32.totalorder %v351, 4
        %v374 = vsel %vm370, %v354, %v357
        %v375 = vsel %vm373, %v363, 2102212464
        %v376 = vsel %vm372, %v360, %v375
        %v377 = vsel %vm371, %v374, %v376
        %v378 = vsel %vm370, %v357, %v360
        %v379 = vsel %vm373, %v366, 920167782
        %v380 = vsel %vm372, %v363, %v379
        %v381 = vsel %vm371, %v378, %v380
        %v382 = vsel %vm370, %v360, %v363
        %v383 = vsel %vm373, %v369, 1326507024
        %v384 = vsel %vm372, %v366, %v383
        %v385 = vsel %vm371, %v382, %v384
        %v386 = vshll.u32 %v346, 8
        %v387 = vmul.u32.u64.compose %v386, %v385
        %v388 = vextract.low.u32 %v387
        %v389 = vextract.high.u32 %v387
        %v390 = vmul.u32.u64.compose %v386, %v381
        %v391 = vextract.low.u32 %v390
        %v392 = vextract.high.u32 %v390
        %v393 = vmul.u32 %v386, %v377
        %v394 = vadd.s32 %v389, %v391
        %vm395 = vc.u32 %v389, %v391
        %v396 = vadd.s32 %v392, 1
        %v397 = vsel %vm395, %v396, %v392
        %v398 = vadd.s32 %v393, %v397
        %v399 = vadd.s32 %v398, 536870912
        %v400 = vshrl.u32 %v399, 30
        %v401 = vshll.u32 %v400, 30
        %v402 = vsub.s32 %v398, %v401
        %vm403 = vcmp.lt.s32.totalorder %v402, 0
        %v404 = vsub.s32 0, %v402
        %v405 = vsel %vm403, %v404, %v402
        %v406 = vclz %v405
        %v407 = vsub.s32 %v406, 2
        %vm408 = vcmp.gt.s32.totalorder 0, %v407
        %v409 = vsel %vm408, 0, %v407
        %v410 = vsub.s32 32, %v409
        %v411 = vshll.u32 %v402, %v409
        %v412 = vshrl.u32 %v394, %v410
        %v413 = vor.u32 %v411, %v412
        %v414 = vsub.s32 4294967266, %v409
        %v415 = vadd.s32 %v414, 127
        %v416 = vshll.u32 %v415, 23
        %v417 = vor.u32 4788187, %v416
        %v418 = vand.u32 2147483647, %v417
        %v420 = vcvt.s32.f32 %v413
        %v421 = vmul.f32 %v420, %v418
        %v422 = vxor.u32 %v421, 2147483648
        %v423 = vsel %vm340, %v422, %v421
        %v424 = vsub.s32 4, %v400
        %v425 = vsel %vm340, %v424, %v400
        %v426 = vsel %vm339, %v320, %v423
        %v427 = vsel %vm339, 0, %v425
        %v428 = vcosq.f32.pop %v426
        %v429 = vsinq.f32.pop %v426
        %vm430 = vweird.f32 %v320
        %v431 = vadd.s32 %v427, 3
        %v432 = vand.u32 %v431, 3
        %vm433 = vcmp.lt.s32.totalorder %v432, 2
        %vm434 = vcmp.eq.s32.totalorder %v432, 0
        %v435 = vxor.u32 %v429, 2147483648
        %v436 = vsel %vm434, %v428, %v435
        %vm437 = vcmp.eq.s32.totalorder %v432, 2
        %v438 = vxor.u32 %v428, 2147483648
        %v439 = vsel %vm437, %v438, %v429
        %v440 = vsel %vm433, %v436, %v439
        %v441 = vsel %vm430, nan, %v440
        %v442 = vand.u32 2147483647, %v325
        %vm443 = vcmp.le.f32.partialorder %v442, 0.7853982
        %vm444 = vcmp.lt.s32.totalorder %v325, 0
        %v445 = vand.u32 %v325, 2139095040
        %v446 = vshrl.u32 %v445, 23
        %v447 = vsub.s32 %v446, 127
        %v448 = vand.u32 2147483647, %v325
        %v449 = vand.u32 %v448, 8388607
        %v450 = vor.u32 %v449, 8388608
        %v451 = vsub.s32 0, %v450
        %v452 = vadd.s32 %v447, 1
        %vm453 = vcmp.gt.s32.totalorder %v452, 0
        %v454 = vsel %vm453, %v452, 0
        %v455 = vshrl.u32 %v454, 5
        %v456 = vand.u32 %v454, 31
        %v457 = vsub.s32 32, %v456
        %v458 = vshrl.u32 683565275, %v457
        %v459 = vshll.u32 683565275, %v456
        %v460 = vshrl.u32 2475754826, %v457
        %v461 = vor.u32 %v459, %v460
        %v462 = vshll.u32 2475754826, %v456
        %v463 = vshrl.u32 2131351028, %v457
        %v464 = vor.u32 %v462, %v463
        %v465 = vshll.u32 2131351028, %v456
        %v466 = vshrl.u32 2102212464, %v457
        %v467 = vor.u32 %v465, %v466
        %v468 = vshll.u32 2102212464, %v456
        %v469 = vshrl.u32 920167782, %v457
        %v470 = vor.u32 %v468, %v469
        %v471 = vshll.u32 920167782, %v456
        %v472 = vshrl.u32 1326507024, %v457
        %v473 = vor.u32 %v471, %v472
        %vm474 = vcmp.lt.s32.totalorder %v455, 1
        %vm475 = vcmp.lt.s32.totalorder %v455, 2
        %vm476 = vcmp.lt.s32.totalorder %v455, 3
        %vm477 = vcmp.lt.s32.totalorder %v455, 4
        %v478 = vsel %vm474, %v458, %v461
        %v479 = vsel %vm477, %v467, 2102212464
        %v480 = vsel %vm476, %v464, %v479
        %v481 = vsel %vm475, %v478, %v480
        %v482 = vsel %vm474, %v461, %v464
        %v483 = vsel %vm477, %v470, 920167782
        %v484 = vsel %vm476, %v467, %v483
        %v485 = vsel %vm475, %v482, %v484
        %v486 = vsel %vm474, %v464, %v467
        %v487 = vsel %vm477, %v473, 1326507024
        %v488 = vsel %vm476, %v470, %v487
        %v489 = vsel %vm475, %v486, %v488
        %v490 = vshll.u32 %v450, 8
        %v491 = vmul.u32.u64.compose %v490, %v489
        %v492 = vextract.low.u32 %v491
        %v493 = vextract.high.u32 %v491
        %v494 = vmul.u32.u64.compose %v490, %v485
        %v495 = vextract.low.u32 %v494
        %v496 = vextract.high.u32 %v494
        %v497 = vmul.u32 %v490, %v481
        %v498 = vadd.s32 %v493, %v495
        %vm499 = vc.u32 %v493, %v495
        %v500 = vadd.s32 %v496, 1
        %v501 = vsel %vm499, %v500, %v496
        %v502 = vadd.s32 %v497, %v501
        %v503 = vadd.s32 %v502, 536870912
        %v504 = vshrl.u32 %v503, 30
        %v505 = vshll.u32 %v504, 30
        %v506 = vsub.s32 %v502, %v505
        %vm507 = vcmp.lt.s32.totalorder %v506, 0
        %v508 = vsub.s32 0, %v506
        %v509 = vsel %vm507, %v508, %v506
        %v510 = vclz %v509
        %v511 = vsub.s32 %v510, 2
        %vm512 = vcmp.gt.s32.totalorder 0, %v511
        %v513 = vsel %vm512, 0, %v511
        %v514 = vsub.s32 32, %v513
        %v515 = vshll.u32 %v506, %v513
        %v516 = vshrl.u32 %v498, %v514
        %v517 = vor.u32 %v515, %v516
        %v518 = vsub.s32 4294967266, %v513
        %v519 = vadd.s32 %v518, 127
        %v520 = vshll.u32 %v519, 23
        %v521 = vor.u32 4788187, %v520
        %v522 = vand.u32 2147483647, %v521
        %v524 = vcvt.s32.f32 %v517
        %v525 = vmul.f32 %v524, %v522
        %v526 = vxor.u32 %v525, 2147483648
        %v527 = vsel %vm444, %v526, %v525
        %v528 = vsub.s32 4, %v504
        %v529 = vsel %vm444, %v528, %v504
        %v530 = vsel %vm443, %v325, %v527
        %v531 = vsel %vm443, 0, %v529
        %v532 = vcosq.f32.pop %v530
        %v533 = vsinq.f32.pop %v530
        %vm534 = vweird.f32 %v325
        %v535 = vadd.s32 %v531, 3
        %v536 = vand.u32 %v535, 3
        %vm537 = vcmp.lt.s32.totalorder %v536, 2
        %vm538 = vcmp.eq.s32.totalorder %v536, 0
        %v539 = vxor.u32 %v533, 2147483648
        %v540 = vsel %vm538, %v532, %v539
        %vm541 = vcmp.eq.s32.totalorder %v536, 2
        %v542 = vxor.u32 %v532, 2147483648
        %v543 = vsel %vm541, %v542, %v533
        %v544 = vsel %vm537, %v540, %v543
        %v545 = vsel %vm534, nan, %v544
        %v546 = vand.u32 2147483647, %v330
        %vm547 = vcmp.le.f32.partialorder %v546, 0.7853982
        %vm548 = vcmp.lt.s32.totalorder %v330, 0
        %v549 = vand.u32 %v330, 2139095040
        %v550 = vshrl.u32 %v549, 23
        %v551 = vsub.s32 %v550, 127
        %v552 = vand.u32 2147483647, %v330
        %v553 = vand.u32 %v552, 8388607
        %v554 = vor.u32 %v553, 8388608
        %v555 = vsub.s32 0, %v554
        %v556 = vadd.s32 %v551, 1
        %vm557 = vcmp.gt.s32.totalorder %v556, 0
        %v558 = vsel %vm557, %v556, 0
        %v559 = vshrl.u32 %v558, 5
        %v560 = vand.u32 %v558, 31
        %v561 = vsub.s32 32, %v560
        %v562 = vshrl.u32 683565275, %v561
        %v563 = vshll.u32 683565275, %v560
        %v564 = vshrl.u32 2475754826, %v561
        %v565 = vor.u32 %v563, %v564
        %v566 = vshll.u32 2475754826, %v560
        %v567 = vshrl.u32 2131351028, %v561
        %v568 = vor.u32 %v566, %v567
        %v569 = vshll.u32 2131351028, %v560
        %v570 = vshrl.u32 2102212464, %v561
        %v571 = vor.u32 %v569, %v570
        %v572 = vshll.u32 2102212464, %v560
        %v573 = vshrl.u32 920167782, %v561
        %v574 = vor.u32 %v572, %v573
        %v575 = vshll.u32 920167782, %v560
        %v576 = vshrl.u32 1326507024, %v561
        %v577 = vor.u32 %v575, %v576
        %vm578 = vcmp.lt.s32.totalorder %v559, 1
        %vm579 = vcmp.lt.s32.totalorder %v559, 2
        %vm580 = vcmp.lt.s32.totalorder %v559, 3
        %vm581 = vcmp.lt.s32.totalorder %v559, 4
        %v582 = vsel %vm578, %v562, %v565
        %v583 = vsel %vm581, %v571, 2102212464
        %v584 = vsel %vm580, %v568, %v583
        %v585 = vsel %vm579, %v582, %v584
        %v586 = vsel %vm578, %v565, %v568
        %v587 = vsel %vm581, %v574, 920167782
        %v588 = vsel %vm580, %v571, %v587
        %v589 = vsel %vm579, %v586, %v588
        %v590 = vsel %vm578, %v568, %v571
        %v591 = vsel %vm581, %v577, 1326507024
        %v592 = vsel %vm580, %v574, %v591
        %v593 = vsel %vm579, %v590, %v592
        %v594 = vshll.u32 %v554, 8
        %v595 = vmul.u32.u64.compose %v594, %v593
        %v596 = vextract.low.u32 %v595
        %v597 = vextract.high.u32 %v595
        %v598 = vmul.u32.u64.compose %v594, %v589
        %v599 = vextract.low.u32 %v598
        %v600 = vextract.high.u32 %v598
        %v601 = vmul.u32 %v594, %v585
        %v602 = vadd.s32 %v597, %v599
        %vm603 = vc.u32 %v597, %v599
        %v604 = vadd.s32 %v600, 1
        %v605 = vsel %vm603, %v604, %v600
        %v606 = vadd.s32 %v601, %v605
        %v607 = vadd.s32 %v606, 536870912
        %v608 = vshrl.u32 %v607, 30
        %v609 = vshll.u32 %v608, 30
        %v610 = vsub.s32 %v606, %v609
        %vm611 = vcmp.lt.s32.totalorder %v610, 0
        %v612 = vsub.s32 0, %v610
        %v613 = vsel %vm611, %v612, %v610
        %v614 = vclz %v613
        %v615 = vsub.s32 %v614, 2
        %vm616 = vcmp.gt.s32.totalorder 0, %v615
        %v617 = vsel %vm616, 0, %v615
        %v618 = vsub.s32 32, %v617
        %v619 = vshll.u32 %v610, %v617
        %v620 = vshrl.u32 %v602, %v618
        %v621 = vor.u32 %v619, %v620
        %v622 = vsub.s32 4294967266, %v617
        %v623 = vadd.s32 %v622, 127
        %v624 = vshll.u32 %v623, 23
        %v625 = vor.u32 4788187, %v624
        %v626 = vand.u32 2147483647, %v625
        %v628 = vcvt.s32.f32 %v621
        %v629 = vmul.f32 %v628, %v626
        %v630 = vxor.u32 %v629, 2147483648
        %v631 = vsel %vm548, %v630, %v629
        %v632 = vsub.s32 4, %v608
        %v633 = vsel %vm548, %v632, %v608
        %v634 = vsel %vm547, %v330, %v631
        %v635 = vsel %vm547, 0, %v633
        %v636 = vcosq.f32.pop %v634
        %v637 = vsinq.f32.pop %v634
        %vm638 = vweird.f32 %v330
        %v639 = vadd.s32 %v635, 3
        %v640 = vand.u32 %v639, 3
        %vm641 = vcmp.lt.s32.totalorder %v640, 2
        %vm642 = vcmp.eq.s32.totalorder %v640, 0
        %v643 = vxor.u32 %v637, 2147483648
        %v644 = vsel %vm642, %v636, %v643
        %vm645 = vcmp.eq.s32.totalorder %v640, 2
        %v646 = vxor.u32 %v636, 2147483648
        %v647 = vsel %vm645, %v646, %v637
        %v648 = vsel %vm641, %v644, %v647
        %v649 = vsel %vm638, nan, %v648
        %v650 = vand.u32 2147483647, %v335
        %vm651 = vcmp.le.f32.partialorder %v650, 0.7853982
        %vm652 = vcmp.lt.s32.totalorder %v335, 0
        %v653 = vand.u32 %v335, 2139095040
        %v654 = vshrl.u32 %v653, 23
        %v655 = vsub.s32 %v654, 127
        %v656 = vand.u32 2147483647, %v335
        %v657 = vand.u32 %v656, 8388607
        %v658 = vor.u32 %v657, 8388608
        %v659 = vsub.s32 0, %v658
        %v660 = vadd.s32 %v655, 1
        %vm661 = vcmp.gt.s32.totalorder %v660, 0
        %v662 = vsel %vm661, %v660, 0
        %v663 = vshrl.u32 %v662, 5
        %v664 = vand.u32 %v662, 31
        %v665 = vsub.s32 32, %v664
        %v666 = vshrl.u32 683565275, %v665
        %v667 = vshll.u32 683565275, %v664
        %v668 = vshrl.u32 2475754826, %v665
        %v669 = vor.u32 %v667, %v668
        %v670 = vshll.u32 2475754826, %v664
        %v671 = vshrl.u32 2131351028, %v665
        %v672 = vor.u32 %v670, %v671
        %v673 = vshll.u32 2131351028, %v664
        %v674 = vshrl.u32 2102212464, %v665
        %v675 = vor.u32 %v673, %v674
        %v676 = vshll.u32 2102212464, %v664
        %v677 = vshrl.u32 920167782, %v665
        %v678 = vor.u32 %v676, %v677
        %v679 = vshll.u32 920167782, %v664
        %v680 = vshrl.u32 1326507024, %v665
        %v681 = vor.u32 %v679, %v680
        %vm682 = vcmp.lt.s32.totalorder %v663, 1
        %vm683 = vcmp.lt.s32.totalorder %v663, 2
        %vm684 = vcmp.lt.s32.totalorder %v663, 3
        %vm685 = vcmp.lt.s32.totalorder %v663, 4
        %v686 = vsel %vm682, %v666, %v669
        %v687 = vsel %vm685, %v675, 2102212464
        %v688 = vsel %vm684, %v672, %v687
        %v689 = vsel %vm683, %v686, %v688
        %v690 = vsel %vm682, %v669, %v672
        %v691 = vsel %vm685, %v678, 920167782
        %v692 = vsel %vm684, %v675, %v691
        %v693 = vsel %vm683, %v690, %v692
        %v694 = vsel %vm682, %v672, %v675
        %v695 = vsel %vm685, %v681, 1326507024
        %v696 = vsel %vm684, %v678, %v695
        %v697 = vsel %vm683, %v694, %v696
        %v698 = vshll.u32 %v658, 8
        %v699 = vmul.u32.u64.compose %v698, %v697
        %v700 = vextract.low.u32 %v699
        %v701 = vextract.high.u32 %v699
        %v702 = vmul.u32.u64.compose %v698, %v693
        %v703 = vextract.low.u32 %v702
        %v704 = vextract.high.u32 %v702
        %v705 = vmul.u32 %v698, %v689
        %v706 = vadd.s32 %v701, %v703
        %vm707 = vc.u32 %v701, %v703
        %v708 = vadd.s32 %v704, 1
        %v709 = vsel %vm707, %v708, %v704
        %v710 = vadd.s32 %v705, %v709
        %v711 = vadd.s32 %v710, 536870912
        %v712 = vshrl.u32 %v711, 30
        %v713 = vshll.u32 %v712, 30
        %v714 = vsub.s32 %v710, %v713
        %vm715 = vcmp.lt.s32.totalorder %v714, 0
        %v716 = vsub.s32 0, %v714
        %v717 = vsel %vm715, %v716, %v714
        %v718 = vclz %v717
        %v719 = vsub.s32 %v718, 2
        %vm720 = vcmp.gt.s32.totalorder 0, %v719
        %v721 = vsel %vm720, 0, %v719
        %v722 = vsub.s32 32, %v721
        %v723 = vshll.u32 %v714, %v721
        %v724 = vshrl.u32 %v706, %v722
        %v725 = vor.u32 %v723, %v724
        %v726 = vsub.s32 4294967266, %v721
        %v727 = vadd.s32 %v726, 127
        %v728 = vshll.u32 %v727, 23
        %v729 = vor.u32 4788187, %v728
        %v730 = vand.u32 2147483647, %v729
        %v732 = vcvt.s32.f32 %v725
        %v733 = vmul.f32 %v732, %v730
        %v734 = vxor.u32 %v733, 2147483648
        %v735 = vsel %vm652, %v734, %v733
        %v736 = vsub.s32 4, %v712
        %v737 = vsel %vm652, %v736, %v712
        %v738 = vsel %vm651, %v335, %v735
        %v739 = vsel %vm651, 0, %v737
        %v740 = vcosq.f32.pop %v738
        %v741 = vsinq.f32.pop %v738
        %vm742 = vweird.f32 %v335
        %v743 = vadd.s32 %v739, 3
        %v744 = vand.u32 %v743, 3
        %vm745 = vcmp.lt.s32.totalorder %v744, 2
        %vm746 = vcmp.eq.s32.totalorder %v744, 0
        %v747 = vxor.u32 %v741, 2147483648
        %v748 = vsel %vm746, %v740, %v747
        %vm749 = vcmp.eq.s32.totalorder %v744, 2
        %v750 = vxor.u32 %v740, 2147483648
        %v751 = vsel %vm749, %v750, %v741
        %v752 = vsel %vm745, %v748, %v751
        %v753 = vsel %vm742, nan, %v752
        %754 = vst [vmem:[%s161] sm:$0xff] %v441
        %755 = vst [vmem:[%s161 + $0x8] sm:$0xff] %v545
        %756 = vst [vmem:[%s161 + $0x10] sm:$0xff] %v649
        %757 = vst [vmem:[%s161 + $0x18] sm:$0xff] %v753
        %v758 = vand.u32 2147483647, %v320
        %vm759 = vcmp.le.f32.partialorder %v758, 0.7853982
        %vm760 = vcmp.lt.s32.totalorder %v320, 0
        %v761 = vand.u32 %v320, 2139095040
        %v762 = vshrl.u32 %v761, 23
        %v763 = vsub.s32 %v762, 127
        %v764 = vand.u32 2147483647, %v320
        %v765 = vand.u32 %v764, 8388607
        %v766 = vor.u32 %v765, 8388608
        %v767 = vsub.s32 0, %v766
        %v768 = vadd.s32 %v763, 1
        %vm769 = vcmp.gt.s32.totalorder %v768, 0
        %v770 = vsel %vm769, %v768, 0
        %v771 = vshrl.u32 %v770, 5
        %v772 = vand.u32 %v770, 31
        %v773 = vsub.s32 32, %v772
        %v774 = vshrl.u32 683565275, %v773
        %v775 = vshll.u32 683565275, %v772
        %v776 = vshrl.u32 2475754826, %v773
        %v777 = vor.u32 %v775, %v776
        %v778 = vshll.u32 2475754826, %v772
        %v779 = vshrl.u32 2131351028, %v773
        %v780 = vor.u32 %v778, %v779
        %v781 = vshll.u32 2131351028, %v772
        %v782 = vshrl.u32 2102212464, %v773
        %v783 = vor.u32 %v781, %v782
        %v784 = vshll.u32 2102212464, %v772
        %v785 = vshrl.u32 920167782, %v773
        %v786 = vor.u32 %v784, %v785
        %v787 = vshll.u32 920167782, %v772
        %v788 = vshrl.u32 1326507024, %v773
        %v789 = vor.u32 %v787, %v788
        %vm790 = vcmp.lt.s32.totalorder %v771, 1
        %vm791 = vcmp.lt.s32.totalorder %v771, 2
        %vm792 = vcmp.lt.s32.totalorder %v771, 3
        %vm793 = vcmp.lt.s32.totalorder %v771, 4
        %v794 = vsel %vm790, %v774, %v777
        %v795 = vsel %vm793, %v783, 2102212464
        %v796 = vsel %vm792, %v780, %v795
        %v797 = vsel %vm791, %v794, %v796
        %v798 = vsel %vm790, %v777, %v780
        %v799 = vsel %vm793, %v786, 920167782
        %v800 = vsel %vm792, %v783, %v799
        %v801 = vsel %vm791, %v798, %v800
        %v802 = vsel %vm790, %v780, %v783
        %v803 = vsel %vm793, %v789, 1326507024
        %v804 = vsel %vm792, %v786, %v803
        %v805 = vsel %vm791, %v802, %v804
        %v806 = vshll.u32 %v766, 8
        %v807 = vmul.u32.u64.compose %v806, %v805
        %v808 = vextract.low.u32 %v807
        %v809 = vextract.high.u32 %v807
        %v810 = vmul.u32.u64.compose %v806, %v801
        %v811 = vextract.low.u32 %v810
        %v812 = vextract.high.u32 %v810
        %v813 = vmul.u32 %v806, %v797
        %v814 = vadd.s32 %v809, %v811
        %vm815 = vc.u32 %v809, %v811
        %v816 = vadd.s32 %v812, 1
        %v817 = vsel %vm815, %v816, %v812
        %v818 = vadd.s32 %v813, %v817
        %v819 = vadd.s32 %v818, 536870912
        %v820 = vshrl.u32 %v819, 30
        %v821 = vshll.u32 %v820, 30
        %v822 = vsub.s32 %v818, %v821
        %vm823 = vcmp.lt.s32.totalorder %v822, 0
        %v824 = vsub.s32 0, %v822
        %v825 = vsel %vm823, %v824, %v822
        %v826 = vclz %v825
        %v827 = vsub.s32 %v826, 2
        %vm828 = vcmp.gt.s32.totalorder 0, %v827
        %v829 = vsel %vm828, 0, %v827
        %v830 = vsub.s32 32, %v829
        %v831 = vshll.u32 %v822, %v829
        %v832 = vshrl.u32 %v814, %v830
        %v833 = vor.u32 %v831, %v832
        %v834 = vsub.s32 4294967266, %v829
        %v835 = vadd.s32 %v834, 127
        %v836 = vshll.u32 %v835, 23
        %v837 = vor.u32 4788187, %v836
        %v838 = vand.u32 2147483647, %v837
        %v840 = vcvt.s32.f32 %v833
        %v841 = vmul.f32 %v840, %v838
        %v842 = vxor.u32 %v841, 2147483648
        %v843 = vsel %vm760, %v842, %v841
        %v844 = vsub.s32 4, %v820
        %v845 = vsel %vm760, %v844, %v820
        %v846 = vsel %vm759, %v320, %v843
        %v847 = vsel %vm759, 0, %v845
        %v848 = vcosq.f32.pop %v846
        %v849 = vsinq.f32.pop %v846
        %vm850 = vweird.f32 %v320
        %v851 = vand.u32 %v847, 3
        %vm852 = vcmp.lt.s32.totalorder %v851, 2
        %vm853 = vcmp.eq.s32.totalorder %v851, 0
        %v854 = vxor.u32 %v849, 2147483648
        %v855 = vsel %vm853, %v848, %v854
        %vm856 = vcmp.eq.s32.totalorder %v851, 2
        %v857 = vxor.u32 %v848, 2147483648
        %v858 = vsel %vm856, %v857, %v849
        %v859 = vsel %vm852, %v855, %v858
        %v860 = vsel %vm850, nan, %v859
        %v861 = vand.u32 2147483647, %v325
        %vm862 = vcmp.le.f32.partialorder %v861, 0.7853982
        %vm863 = vcmp.lt.s32.totalorder %v325, 0
        %v864 = vand.u32 %v325, 2139095040
        %v865 = vshrl.u32 %v864, 23
        %v866 = vsub.s32 %v865, 127
        %v867 = vand.u32 2147483647, %v325
        %v868 = vand.u32 %v867, 8388607
        %v869 = vor.u32 %v868, 8388608
        %v870 = vsub.s32 0, %v869
        %v871 = vadd.s32 %v866, 1
        %vm872 = vcmp.gt.s32.totalorder %v871, 0
        %v873 = vsel %vm872, %v871, 0
        %v874 = vshrl.u32 %v873, 5
        %v875 = vand.u32 %v873, 31
        %v876 = vsub.s32 32, %v875
        %v877 = vshrl.u32 683565275, %v876
        %v878 = vshll.u32 683565275, %v875
        %v879 = vshrl.u32 2475754826, %v876
        %v880 = vor.u32 %v878, %v879
        %v881 = vshll.u32 2475754826, %v875
        %v882 = vshrl.u32 2131351028, %v876
        %v883 = vor.u32 %v881, %v882
        %v884 = vshll.u32 2131351028, %v875
        %v885 = vshrl.u32 2102212464, %v876
        %v886 = vor.u32 %v884, %v885
        %v887 = vshll.u32 2102212464, %v875
        %v888 = vshrl.u32 920167782, %v876
        %v889 = vor.u32 %v887, %v888
        %v890 = vshll.u32 920167782, %v875
        %v891 = vshrl.u32 1326507024, %v876
        %v892 = vor.u32 %v890, %v891
        %vm893 = vcmp.lt.s32.totalorder %v874, 1
        %vm894 = vcmp.lt.s32.totalorder %v874, 2
        %vm895 = vcmp.lt.s32.totalorder %v874, 3
        %vm896 = vcmp.lt.s32.totalorder %v874, 4
        %v897 = vsel %vm893, %v877, %v880
        %v898 = vsel %vm896, %v886, 2102212464
        %v899 = vsel %vm895, %v883, %v898
        %v900 = vsel %vm894, %v897, %v899
        %v901 = vsel %vm893, %v880, %v883
        %v902 = vsel %vm896, %v889, 920167782
        %v903 = vsel %vm895, %v886, %v902
        %v904 = vsel %vm894, %v901, %v903
        %v905 = vsel %vm893, %v883, %v886
        %v906 = vsel %vm896, %v892, 1326507024
        %v907 = vsel %vm895, %v889, %v906
        %v908 = vsel %vm894, %v905, %v907
        %v909 = vshll.u32 %v869, 8
        %v910 = vmul.u32.u64.compose %v909, %v908
        %v911 = vextract.low.u32 %v910
        %v912 = vextract.high.u32 %v910
        %v913 = vmul.u32.u64.compose %v909, %v904
        %v914 = vextract.low.u32 %v913
        %v915 = vextract.high.u32 %v913
        %v916 = vmul.u32 %v909, %v900
        %v917 = vadd.s32 %v912, %v914
        %vm918 = vc.u32 %v912, %v914
        %v919 = vadd.s32 %v915, 1
        %v920 = vsel %vm918, %v919, %v915
        %v921 = vadd.s32 %v916, %v920
        %v922 = vadd.s32 %v921, 536870912
        %v923 = vshrl.u32 %v922, 30
        %v924 = vshll.u32 %v923, 30
        %v925 = vsub.s32 %v921, %v924
        %vm926 = vcmp.lt.s32.totalorder %v925, 0
        %v927 = vsub.s32 0, %v925
        %v928 = vsel %vm926, %v927, %v925
        %v929 = vclz %v928
        %v930 = vsub.s32 %v929, 2
        %vm931 = vcmp.gt.s32.totalorder 0, %v930
        %v932 = vsel %vm931, 0, %v930
        %v933 = vsub.s32 32, %v932
        %v934 = vshll.u32 %v925, %v932
        %v935 = vshrl.u32 %v917, %v933
        %v936 = vor.u32 %v934, %v935
        %v937 = vsub.s32 4294967266, %v932
        %v938 = vadd.s32 %v937, 127
        %v939 = vshll.u32 %v938, 23
        %v940 = vor.u32 4788187, %v939
        %v941 = vand.u32 2147483647, %v940
        %v943 = vcvt.s32.f32 %v936
        %v944 = vmul.f32 %v943, %v941
        %v945 = vxor.u32 %v944, 2147483648
        %v946 = vsel %vm863, %v945, %v944
        %v947 = vsub.s32 4, %v923
        %v948 = vsel %vm863, %v947, %v923
        %v949 = vsel %vm862, %v325, %v946
        %v950 = vsel %vm862, 0, %v948
        %v951 = vcosq.f32.pop %v949
        %v952 = vsinq.f32.pop %v949
        %vm953 = vweird.f32 %v325
        %v954 = vand.u32 %v950, 3
        %vm955 = vcmp.lt.s32.totalorder %v954, 2
        %vm956 = vcmp.eq.s32.totalorder %v954, 0
        %v957 = vxor.u32 %v952, 2147483648
        %v958 = vsel %vm956, %v951, %v957
        %vm959 = vcmp.eq.s32.totalorder %v954, 2
        %v960 = vxor.u32 %v951, 2147483648
        %v961 = vsel %vm959, %v960, %v952
        %v962 = vsel %vm955, %v958, %v961
        %v963 = vsel %vm953, nan, %v962
        %v964 = vand.u32 2147483647, %v330
        %vm965 = vcmp.le.f32.partialorder %v964, 0.7853982
        %vm966 = vcmp.lt.s32.totalorder %v330, 0
        %v967 = vand.u32 %v330, 2139095040
        %v968 = vshrl.u32 %v967, 23
        %v969 = vsub.s32 %v968, 127
        %v970 = vand.u32 2147483647, %v330
        %v971 = vand.u32 %v970, 8388607
        %v972 = vor.u32 %v971, 8388608
        %v973 = vsub.s32 0, %v972
        %v974 = vadd.s32 %v969, 1
        %vm975 = vcmp.gt.s32.totalorder %v974, 0
        %v976 = vsel %vm975, %v974, 0
        %v977 = vshrl.u32 %v976, 5
        %v978 = vand.u32 %v976, 31
        %v979 = vsub.s32 32, %v978
        %v980 = vshrl.u32 683565275, %v979
        %v981 = vshll.u32 683565275, %v978
        %v982 = vshrl.u32 2475754826, %v979
        %v983 = vor.u32 %v981, %v982
        %v984 = vshll.u32 2475754826, %v978
        %v985 = vshrl.u32 2131351028, %v979
        %v986 = vor.u32 %v984, %v985
        %v987 = vshll.u32 2131351028, %v978
        %v988 = vshrl.u32 2102212464, %v979
        %v989 = vor.u32 %v987, %v988
        %v990 = vshll.u32 2102212464, %v978
        %v991 = vshrl.u32 920167782, %v979
        %v992 = vor.u32 %v990, %v991
        %v993 = vshll.u32 920167782, %v978
        %v994 = vshrl.u32 1326507024, %v979
        %v995 = vor.u32 %v993, %v994
        %vm996 = vcmp.lt.s32.totalorder %v977, 1
        %vm997 = vcmp.lt.s32.totalorder %v977, 2
        %vm998 = vcmp.lt.s32.totalorder %v977, 3
        %vm999 = vcmp.lt.s32.totalorder %v977, 4
        %v1000 = vsel %vm996, %v980, %v983
        %v1001 = vsel %vm999, %v989, 2102212464
        %v1002 = vsel %vm998, %v986, %v1001
        %v1003 = vsel %vm997, %v1000, %v1002
        %v1004 = vsel %vm996, %v983, %v986
        %v1005 = vsel %vm999, %v992, 920167782
        %v1006 = vsel %vm998, %v989, %v1005
        %v1007 = vsel %vm997, %v1004, %v1006
        %v1008 = vsel %vm996, %v986, %v989
        %v1009 = vsel %vm999, %v995, 1326507024
        %v1010 = vsel %vm998, %v992, %v1009
        %v1011 = vsel %vm997, %v1008, %v1010
        %v1012 = vshll.u32 %v972, 8
        %v1013 = vmul.u32.u64.compose %v1012, %v1011
        %v1014 = vextract.low.u32 %v1013
        %v1015 = vextract.high.u32 %v1013
        %v1016 = vmul.u32.u64.compose %v1012, %v1007
        %v1017 = vextract.low.u32 %v1016
        %v1018 = vextract.high.u32 %v1016
        %v1019 = vmul.u32 %v1012, %v1003
        %v1020 = vadd.s32 %v1015, %v1017
        %vm1021 = vc.u32 %v1015, %v1017
        %v1022 = vadd.s32 %v1018, 1
        %v1023 = vsel %vm1021, %v1022, %v1018
        %v1024 = vadd.s32 %v1019, %v1023
        %v1025 = vadd.s32 %v1024, 536870912
        %v1026 = vshrl.u32 %v1025, 30
        %v1027 = vshll.u32 %v1026, 30
        %v1028 = vsub.s32 %v1024, %v1027
        %vm1029 = vcmp.lt.s32.totalorder %v1028, 0
        %v1030 = vsub.s32 0, %v1028
        %v1031 = vsel %vm1029, %v1030, %v1028
        %v1032 = vclz %v1031
        %v1033 = vsub.s32 %v1032, 2
        %vm1034 = vcmp.gt.s32.totalorder 0, %v1033
        %v1035 = vsel %vm1034, 0, %v1033
        %v1036 = vsub.s32 32, %v1035
        %v1037 = vshll.u32 %v1028, %v1035
        %v1038 = vshrl.u32 %v1020, %v1036
        %v1039 = vor.u32 %v1037, %v1038
        %v1040 = vsub.s32 4294967266, %v1035
        %v1041 = vadd.s32 %v1040, 127
        %v1042 = vshll.u32 %v1041, 23
        %v1043 = vor.u32 4788187, %v1042
        %v1044 = vand.u32 2147483647, %v1043
        %v1046 = vcvt.s32.f32 %v1039
        %v1047 = vmul.f32 %v1046, %v1044
        %v1048 = vxor.u32 %v1047, 2147483648
        %v1049 = vsel %vm966, %v1048, %v1047
        %v1050 = vsub.s32 4, %v1026
        %v1051 = vsel %vm966, %v1050, %v1026
        %v1052 = vsel %vm965, %v330, %v1049
        %v1053 = vsel %vm965, 0, %v1051
        %v1054 = vcosq.f32.pop %v1052
        %v1055 = vsinq.f32.pop %v1052
        %vm1056 = vweird.f32 %v330
        %v1057 = vand.u32 %v1053, 3
        %vm1058 = vcmp.lt.s32.totalorder %v1057, 2
        %vm1059 = vcmp.eq.s32.totalorder %v1057, 0
        %v1060 = vxor.u32 %v1055, 2147483648
        %v1061 = vsel %vm1059, %v1054, %v1060
        %vm1062 = vcmp.eq.s32.totalorder %v1057, 2
        %v1063 = vxor.u32 %v1054, 2147483648
        %v1064 = vsel %vm1062, %v1063, %v1055
        %v1065 = vsel %vm1058, %v1061, %v1064
        %v1066 = vsel %vm1056, nan, %v1065
        %v1067 = vand.u32 2147483647, %v335
        %vm1068 = vcmp.le.f32.partialorder %v1067, 0.7853982
        %vm1069 = vcmp.lt.s32.totalorder %v335, 0
        %v1070 = vand.u32 %v335, 2139095040
        %v1071 = vshrl.u32 %v1070, 23
        %v1072 = vsub.s32 %v1071, 127
        %v1073 = vand.u32 2147483647, %v335
        %v1074 = vand.u32 %v1073, 8388607
        %v1075 = vor.u32 %v1074, 8388608
        %v1076 = vsub.s32 0, %v1075
        %v1077 = vadd.s32 %v1072, 1
        %vm1078 = vcmp.gt.s32.totalorder %v1077, 0
        %v1079 = vsel %vm1078, %v1077, 0
        %v1080 = vshrl.u32 %v1079, 5
        %v1081 = vand.u32 %v1079, 31
        %v1082 = vsub.s32 32, %v1081
        %v1083 = vshrl.u32 683565275, %v1082
        %v1084 = vshll.u32 683565275, %v1081
        %v1085 = vshrl.u32 2475754826, %v1082
        %v1086 = vor.u32 %v1084, %v1085
        %v1087 = vshll.u32 2475754826, %v1081
        %v1088 = vshrl.u32 2131351028, %v1082
        %v1089 = vor.u32 %v1087, %v1088
        %v1090 = vshll.u32 2131351028, %v1081
        %v1091 = vshrl.u32 2102212464, %v1082
        %v1092 = vor.u32 %v1090, %v1091
        %v1093 = vshll.u32 2102212464, %v1081
        %v1094 = vshrl.u32 920167782, %v1082
        %v1095 = vor.u32 %v1093, %v1094
        %v1096 = vshll.u32 920167782, %v1081
        %v1097 = vshrl.u32 1326507024, %v1082
        %v1098 = vor.u32 %v1096, %v1097
        %vm1099 = vcmp.lt.s32.totalorder %v1080, 1
        %vm1100 = vcmp.lt.s32.totalorder %v1080, 2
        %vm1101 = vcmp.lt.s32.totalorder %v1080, 3
        %vm1102 = vcmp.lt.s32.totalorder %v1080, 4
        %v1103 = vsel %vm1099, %v1083, %v1086
        %v1104 = vsel %vm1102, %v1092, 2102212464
        %v1105 = vsel %vm1101, %v1089, %v1104
        %v1106 = vsel %vm1100, %v1103, %v1105
        %v1107 = vsel %vm1099, %v1086, %v1089
        %v1108 = vsel %vm1102, %v1095, 920167782
        %v1109 = vsel %vm1101, %v1092, %v1108
        %v1110 = vsel %vm1100, %v1107, %v1109
        %v1111 = vsel %vm1099, %v1089, %v1092
        %v1112 = vsel %vm1102, %v1098, 1326507024
        %v1113 = vsel %vm1101, %v1095, %v1112
        %v1114 = vsel %vm1100, %v1111, %v1113
        %v1115 = vshll.u32 %v1075, 8
        %v1116 = vmul.u32.u64.compose %v1115, %v1114
        %v1117 = vextract.low.u32 %v1116
        %v1118 = vextract.high.u32 %v1116
        %v1119 = vmul.u32.u64.compose %v1115, %v1110
        %v1120 = vextract.low.u32 %v1119
        %v1121 = vextract.high.u32 %v1119
        %v1122 = vmul.u32 %v1115, %v1106
        %v1123 = vadd.s32 %v1118, %v1120
        %vm1124 = vc.u32 %v1118, %v1120
        %v1125 = vadd.s32 %v1121, 1
        %v1126 = vsel %vm1124, %v1125, %v1121
        %v1127 = vadd.s32 %v1122, %v1126
        %v1128 = vadd.s32 %v1127, 536870912
        %v1129 = vshrl.u32 %v1128, 30
        %v1130 = vshll.u32 %v1129, 30
        %v1131 = vsub.s32 %v1127, %v1130
        %vm1132 = vcmp.lt.s32.totalorder %v1131, 0
        %v1133 = vsub.s32 0, %v1131
        %v1134 = vsel %vm1132, %v1133, %v1131
        %v1135 = vclz %v1134
        %v1136 = vsub.s32 %v1135, 2
        %vm1137 = vcmp.gt.s32.totalorder 0, %v1136
        %v1138 = vsel %vm1137, 0, %v1136
        %v1139 = vsub.s32 32, %v1138
        %v1140 = vshll.u32 %v1131, %v1138
        %v1141 = vshrl.u32 %v1123, %v1139
        %v1142 = vor.u32 %v1140, %v1141
        %v1143 = vsub.s32 4294967266, %v1138
        %v1144 = vadd.s32 %v1143, 127
        %v1145 = vshll.u32 %v1144, 23
        %v1146 = vor.u32 4788187, %v1145
        %v1147 = vand.u32 2147483647, %v1146
        %v1149 = vcvt.s32.f32 %v1142
        %v1150 = vmul.f32 %v1149, %v1147
        %v1151 = vxor.u32 %v1150, 2147483648
        %v1152 = vsel %vm1069, %v1151, %v1150
        %v1153 = vsub.s32 4, %v1129
        %v1154 = vsel %vm1069, %v1153, %v1129
        %v1155 = vsel %vm1068, %v335, %v1152
        %v1156 = vsel %vm1068, 0, %v1154
        %v1157 = vcosq.f32.pop %v1155
        %v1158 = vsinq.f32.pop %v1155
        %vm1159 = vweird.f32 %v335
        %v1160 = vand.u32 %v1156, 3
        %vm1161 = vcmp.lt.s32.totalorder %v1160, 2
        %vm1162 = vcmp.eq.s32.totalorder %v1160, 0
        %v1163 = vxor.u32 %v1158, 2147483648
        %v1164 = vsel %vm1162, %v1157, %v1163
        %vm1165 = vcmp.eq.s32.totalorder %v1160, 2
        %v1166 = vxor.u32 %v1157, 2147483648
        %v1167 = vsel %vm1165, %v1166, %v1158
        %v1168 = vsel %vm1161, %v1164, %v1167
        %v1169 = vsel %vm1159, nan, %v1168
        %1170 = vst [vmem:[%s161 + $0x20] sm:$0xff] %v860
        %1171 = vst [vmem:[%s161 + $0x28] sm:$0xff] %v963
        %1172 = vst [vmem:[%s161 + $0x30] sm:$0xff] %v1066
        %1173 = vst [vmem:[%s161 + $0x38] sm:$0xff] %v1169
        %s1174 = sand.u32 %s87, 1
        %s1175 = scalar_lea.sflag [#allocation3], %s1174
        %s1176 = sand.u32 %s87, 1
        %s1177 = smul.addr %s1176, 64
        %s1178 = scalar_lea.vmem [#allocation2], %s1177
        // Predicated region
        $region29: #{tpu_custom_call.1} parent=27 // pred_check
          %p1179 = pneg %p97
        $region30: #{tpu_custom_call.1} parent=27 // pred_check_branch
          %1181 = sbr.rel (%p1179) target = $region32
        $region31: #{tpu_custom_call.1} parent=27 // pred_region
          %s1183 = ssub.s32 1024, 1024
          %1184 = vsyncadd %s1175, %s1183
          %s1185 = smul.addr %s21, 8
          %s1186 = sadd.s32 %s20, %s1185
          %s1187 = smul.addr %s1186, 128
          %s1188 = scalar_lea.hbm %s2, %s1187
          %s1189 = sshll.u32 %s1178, 4
          %s1190 = int_to_ptr.vmem [resolvable:$true] %s1189
          %1195 = dma.vmem_to_hbm [thread:$0]  %s1190, 1024, %s1188, %s1175, 128, 128, 8
        $region32: #{tpu_custom_call.1} parent=27 // pred_fallthru
          _
      $region28: #{tpu_custom_call.1} parent=5 // pred_fallthru
        _
      %p1196 = scmp.le.s32.totalorder 2, %s11
      // Predicated region
      $region33: #{tpu_custom_call.1} parent=5 // pred_check
        %p1197 = pneg %p1196
      $region34: #{tpu_custom_call.1} parent=5 // pred_check_branch
        %1199 = sbr.rel (%p1197) target = $region36
      $region35: #{tpu_custom_call.1} parent=5 // pred_region
        %s1200 = ssub.s32 %s11, 2
        // Predicated region
        $region37: #{tpu_custom_call.1} parent=35 // pred_check
          %p1201 = pneg %p103
        $region38: #{tpu_custom_call.1} parent=35 // pred_check_branch
          %1203 = sbr.rel (%p1201) target = $region40
        $region39: #{tpu_custom_call.1} parent=35 // pred_region
          %s1204 = sand.u32 %s88, 1
          %s1205 = scalar_lea.sflag [#allocation3], %s1204
          %s1206 = sand.u32 %s88, 1
          %s1207 = smul.addr %s1206, 64
          %s1208 = scalar_lea.vmem [#allocation2], %s1207
          %1209 = dma.done %s1205, 1024
        $region40: #{tpu_custom_call.1} parent=35 // pred_fallthru
          _
      $region36: #{tpu_custom_call.1} parent=5 // pred_fallthru
        _
    $region6: #{tpu_custom_call.1} parent=1 // loop_footer
      %s15 = sadd.s32 1, %s11
    $region7: #{tpu_custom_call.1} parent=1 // loop_footer_branch
      %10 = sbr.rel target = $region3
    $region8: #{tpu_custom_call.1} parent=1 // loop_exit
      _
    %1210 = vsyncpa [#allocation3], 1
    %s1211 = scalar_lea.sflag [#allocation3], 1
    %1212 = vsyncpa %s1211, 1

</llo_original>
